<compile_context>
chip_gen: v6e
topology: v6e:2x2x1
jax: 0.10.0
libtpu: 0.0.40
codegen_flags: <defaults>
</compile_context>

<pallas_src>
import functools

import jax
import jax.numpy as jnp
from jax.experimental import pallas as pl
from jax.experimental.pallas import tpu as pltpu


# ---------------------------------------------------------------------------
# Kernels
# ---------------------------------------------------------------------------

def _mlp_resident_kernel(x_ref, w1_ref, b1_ref, w2_ref, b2_ref, w3_ref, b3_ref,
                         o_ref):
    # Cast the activation tile to the (stored) weight dtype inside the kernel.
    x = x_ref[...].astype(w1_ref.dtype)
    # Layer 1: (bb, N) @ (N, 64N) + b1 -> ReLU; downcast fused into the epilogue.
    h1 = jnp.dot(x, w1_ref[...], preferred_element_type=jnp.float32)
    h1 = jnp.maximum(h1 + b1_ref[...], 0.0).astype(w2_ref.dtype)
    # Layer 2: (bb, 64N) @ (64N, 32N) + b2 -> ReLU; downcast fused.
    h2 = jnp.dot(h1, w2_ref[...], preferred_element_type=jnp.float32)
    h2 = jnp.maximum(h2 + b2_ref[...], 0.0).astype(w3_ref.dtype)
    # Layer 3 (raw logits, CrossEntropyLoss): (bb, 32N) @ (32N, 256) + b3.
    out = jnp.dot(h2, w3_ref[...], preferred_element_type=jnp.float32)
    o_ref[...] = (out + b3_ref[...]).astype(o_ref.dtype)


def _mlp_stream_kernel(x_ref, w1_ref, b1_ref, w2_ref, b2_ref, w3_ref, b3_ref,
                       o_ref, h1_ref, acc_ref):
    # Grid = (batch tiles [parallel], H2 slabs [arbitrary, innermost]).
    # w2 column slabs (64N, tH2) and w3 row slabs (tH2, 256) are streamed with the
    # default double-buffered pipeline; h1 and the layer-3 accumulator persist in
    # VMEM scratch across the inner axis.
    j = pl.program_id(1)

    @pl.when(j == 0)
    def _():
        x = x_ref[...].astype(w1_ref.dtype)
        h1 = jnp.dot(x, w1_ref[...], preferred_element_type=jnp.float32)
        h1_ref[...] = jnp.maximum(h1 + b1_ref[...], 0.0).astype(h1_ref.dtype)
        acc_ref[...] = jnp.zeros_like(acc_ref)

    h2 = jnp.dot(h1_ref[...], w2_ref[...], preferred_element_type=jnp.float32)
    h2 = jnp.maximum(h2 + b2_ref[...], 0.0).astype(w3_ref.dtype)
    acc_ref[...] += jnp.dot(h2, w3_ref[...], preferred_element_type=jnp.float32)

    @pl.when(j == pl.num_programs(1) - 1)
    def _():
        o_ref[...] = (acc_ref[...] + b3_ref[...]).astype(o_ref.dtype)


# ---------------------------------------------------------------------------
# Sizing helpers
# ---------------------------------------------------------------------------

def _round_up(x, m):
    return (x + m - 1) // m * m


def _physical_vmem_bytes():
    try:
        return int(pltpu.get_tpu_info().vmem_capacity_bytes)
    except Exception:  # hardware query only; never masks kernel errors
        return 64 << 20  # conservative: v7x VMEM per TensorCore


def _pick_vmem_limit(needed_bytes):
    cap = _physical_vmem_bytes() - (8 << 20)
    want = int(needed_bytes * 1.25) + (4 << 20)
    return int(max(min(want, cap), 16 << 20))


def _resident_vmem_bytes(N, H1, H2, OUT, bb, w_item, x_item, wbufs):
    return ((N * H1 + H1 * H2 + H2 * OUT) * w_item * wbufs   # weights
            + (H1 + H2 + OUT) * 4 * wbufs                    # biases (f32)
            + 2 * bb * N * x_item                            # double-buffered x tile
            + 2 * bb * OUT * 4                               # double-buffered out tile
            + bb * (H1 + H2 + OUT) * 4                       # f32 matmul results
            + bb * (H1 + H2) * w_item)                       # downcast h1/h2 copies


def _stream_vmem_bytes(N, H1, H2, OUT, bb, th2, w_item, x_item, wbufs):
    return (N * H1 * w_item * wbufs + (H1 + OUT) * 4 * wbufs            # resident w1/b1/b3
            + 2 * (H1 * th2 * w_item + th2 * 4 + th2 * OUT * w_item)    # streamed w2/b2/w3 slabs
            + 2 * bb * N * x_item                                       # x tile
            + 2 * bb * OUT * 4                                          # out tile
            + bb * H1 * w_item + bb * OUT * 4                           # h1 / acc scratch
            + bb * (H1 + th2 + OUT) * 4 + bb * th2 * w_item)            # live intermediates


_BUFFERED_OK = None


def _supports_single_buffer():
    """Narrow feature-detect for BlockSpec(pipeline_mode=pl.Buffered(1))."""
    global _BUFFERED_OK
    if _BUFFERED_OK is None:
        ok = hasattr(pl, "Buffered")
        if ok:
            try:
                pl.BlockSpec((8, 128), lambda i: (0, 0), pipeline_mode=pl.Buffered(1))
            except TypeError:
                ok = False
        _BUFFERED_OK = ok
    return _BUFFERED_OK


# ---------------------------------------------------------------------------
# pallas_call wrapper
# ---------------------------------------------------------------------------

@functools.partial(
    jax.jit,
    static_argnames=("bb", "single_buffer_weights", "stream", "th2"))
def _mlp_forward(x, w1, b1, w2, b2, w3, b3, *, bb, single_buffer_weights,
                 stream, th2):
    B, N = x.shape
    H1 = w1.shape[1]   # 64N
    H2 = w2.shape[1]   # 32N
    OUT = w3.shape[1]  # 256

    B_pad = _round_up(B, bb)
    if B_pad != B:
        x = jnp.pad(x, ((0, B_pad - B), (0, 0)))   # zero rows, sliced off below

    w_item = jnp.dtype(w1.dtype).itemsize
    x_item = jnp.dtype(x.dtype).itemsize
    wbufs = 1 if single_buffer_weights else 2

    def wspec(shape, index_map):
        # Grid-invariant weights/biases: keep a single resident copy when supported.
        if single_buffer_weights:
            return pl.BlockSpec(shape, index_map, pipeline_mode=pl.Buffered(1))
        return pl.BlockSpec(shape, index_map)

    if not stream:
        needed = _resident_vmem_bytes(N, H1, H2, OUT, bb, w_item, x_item, wbufs)
        grid_spec = pltpu.PrefetchScalarGridSpec(
            num_scalar_prefetch=0,
            grid=(B_pad // bb,),
            in_specs=[
                pl.BlockSpec((bb, N), lambda i: (i, 0)),   # x tile (pipelined)
                wspec((N, H1), lambda i: (0, 0)),          # w1 (resident)
                wspec((1, H1), lambda i: (0, 0)),          # b1
                wspec((H1, H2), lambda i: (0, 0)),         # w2
                wspec((1, H2), lambda i: (0, 0)),          # b2
                wspec((H2, OUT), lambda i: (0, 0)),        # w3
                wspec((1, OUT), lambda i: (0, 0)),         # b3
            ],
            out_specs=pl.BlockSpec((bb, OUT), lambda i: (i, 0)),
        )
        kernel = _mlp_resident_kernel
        dims = ("parallel",)
    else:
        needed = _stream_vmem_bytes(N, H1, H2, OUT, bb, th2, w_item, x_item, wbufs)
        grid_spec = pltpu.PrefetchScalarGridSpec(
            num_scalar_prefetch=0,
            grid=(B_pad // bb, H2 // th2),
            in_specs=[
                pl.BlockSpec((bb, N), lambda i, j: (i, 0)),    # x tile (per batch tile)
                wspec((N, H1), lambda i, j: (0, 0)),           # w1 (resident)
                wspec((1, H1), lambda i, j: (0, 0)),           # b1
                pl.BlockSpec((H1, th2), lambda i, j: (0, j)),  # streamed w2 column slab
                pl.BlockSpec((1, th2), lambda i, j: (0, j)),   # streamed b2 slab
                pl.BlockSpec((th2, OUT), lambda i, j: (j, 0)), # streamed w3 row slab
                wspec((1, OUT), lambda i, j: (0, 0)),          # b3
            ],
            out_specs=pl.BlockSpec((bb, OUT), lambda i, j: (i, 0)),
            scratch_shapes=[
                pltpu.VMEM((bb, H1), w1.dtype),      # persistent h1 (compute dtype)
                pltpu.VMEM((bb, OUT), jnp.float32),  # layer-3 accumulator
            ],
        )
        kernel = _mlp_stream_kernel
        dims = ("parallel", "arbitrary")

    out = pl.pallas_call(
        kernel,
        out_shape=jax.ShapeDtypeStruct((B_pad, OUT), jnp.float32),
        grid_spec=grid_spec,
        compiler_params=pltpu.CompilerParams(
            dimension_semantics=dims,
            vmem_limit_bytes=_pick_vmem_limit(needed),
        ),
    )(x, w1, b1, w2, b2, w3, b3)

    return out[:B] if B_pad != B else out


def mlp_n_64n_32n_256(x, w1, b1, w2, b2, w3, b3, *, block_b=256,
                      force_stream=None):
    """Forward pass of MLP_N_64N_32N_256.

    Weights are consumed in their stored dtype (store them bf16 once for the fast
    MXU path); x is cast inside the kernel. Biases should be f32 of shape (1, out).
    """
    B, N = x.shape
    H1, H2, OUT = w1.shape[1], w2.shape[1], w3.shape[1]

    # Batch tile: multiple of 8 (128/256 preferred; on v6e with large B a 512-row
    # tile also fits). Halve until the batch grid has >= 2 steps when possible so
    # v7x's two TensorCores both get work.
    bb = max(8, _round_up(block_b, 8))
    while bb > 8 and pl.cdiv(B, bb) < 2:
        bb = max(8, _round_up(bb // 2, 8))

    # H2 slab width for the streamed path (lane-dim multiple of 128).
    th2 = H2
    for t in (512, 256, 128):
        if H2 % t == 0:
            th2 = t
            break

    w_item = jnp.dtype(w1.dtype).itemsize
    x_item = jnp.dtype(x.dtype).itemsize
    cap = _physical_vmem_bytes() - (8 << 20)

    def run(single_buffer):
        wbufs = 1 if single_buffer else 2
        if force_stream is not None:
            stream = bool(force_stream)
        else:
            stream = _resident_vmem_bytes(
                N, H1, H2, OUT, bb, w_item, x_item, wbufs) > cap
        return _mlp_forward(x, w1, b1, w2, b2, w3, b3, bb=bb,
                            single_buffer_weights=single_buffer,
                            stream=stream, th2=th2)

    if _supports_single_buffer():
        try:
            return run(True)
        except (pltpu.LoweringException, NotImplementedError):
            pass  # narrow fallback: single-buffered weights rejected by lowering
    return run(False)


# ---------------------------------------------------------------------------
# Params / reference / demo
# ---------------------------------------------------------------------------

def init_params(key, N, param_dtype=jnp.float32):
    """torch.nn.Linear-style init (+-1/sqrt(fan_in)); weights stored (in, out)."""
    widths = [N, 64 * N, 32 * N, 256]
    params = []
    for fan_in, fan_out in zip(widths[:-1], widths[1:]):
        key, kw, kb = jax.random.split(key, 3)
        bound = float(fan_in) ** -0.5
        w = jax.random.uniform(kw, (fan_in, fan_out), jnp.float32, -bound, bound)
        b = jax.random.uniform(kb, (1, fan_out), jnp.float32, -bound, bound)
        params.extend([w.astype(param_dtype), b])
    return params


def reference_forward(x, w1, b1, w2, b2, w3, b3):
    h = jnp.maximum(x @ w1 + b1, 0.0)
    h = jnp.maximum(h @ w2 + b2, 0.0)
    return h @ w3 + b3


if __name__ == "__main__":
    key = jax.random.PRNGKey(0)

    # --- resident-weight path: N=4 -> widths [4, 256, 128, 256] ---
    N, B = 4, 200   # B deliberately NOT a multiple of the batch tile -> padding path
    key, kx = jax.random.split(key)
    x = jax.random.normal(kx, (B, N), jnp.float32)
    w1, b1, w2, b2, w3, b3 = init_params(key, N, param_dtype=jnp.float32)
    ref = reference_forward(x, w1, b1, w2, b2, w3, b3)

    # f32 weights: tight check vs reference.
    out_f32 = jax.block_until_ready(mlp_n_64n_32n_256(x, w1, b1, w2, b2, w3, b3))
    assert out_f32.shape == (B, 256), out_f32.shape
    assert jnp.allclose(out_f32, ref, atol=1e-4, rtol=1e-4), "f32 mismatch vs reference"

    # bf16 weights: cast ONCE here (not per call); kernel casts x internally.
    w1b, w2b, w3b = (w.astype(jnp.bfloat16) for w in (w1, w2, w3))
    out_bf16 = jax.block_until_ready(mlp_n_64n_32n_256(x, w1b, b1, w2b, b2, w3b, b3))
    assert out_bf16.shape == (B, 256), out_bf16.shape
    rel_err = jnp.max(jnp.abs(out_bf16 - ref)) / (jnp.max(jnp.abs(ref)) + 1e-6)
    assert rel_err < 5e-2, f"bf16 relative error too high: {rel_err}"

    # --- streamed w2/w3 path (forced): N=8 -> H2=256 gives 2 inner slabs ---
    N2, B2 = 8, 64
    key, kx2 = jax.random.split(key)
    x2 = jax.random.normal(kx2, (B2, N2), jnp.float32)
    p2 = init_params(key, N2, param_dtype=jnp.float32)
    ref2 = reference_forward(x2, *p2)
    out_s = jax.block_until_ready(mlp_n_64n_32n_256(x2, *p2, force_stream=True))
    assert out_s.shape == (B2, 256), out_s.shape
    assert jnp.allclose(out_s, ref2, atol=5e-4, rtol=5e-4), "streamed path mismatch"

    print("KERNEL_OK")
</pallas_src>

<mosaic_0001>
module attributes {stable_mosaic.version = 11 : i64} {
  func.func @_mlp_resident_kernel(%arg0: i32, %arg1: memref<128x4xf32, #tpu.memory_space<vmem>>, %arg2: memref<4x256xf32, #tpu.memory_space<vmem>>, %arg3: memref<1x256xf32, #tpu.memory_space<vmem>>, %arg4: memref<256x128xf32, #tpu.memory_space<vmem>>, %arg5: memref<1x128xf32, #tpu.memory_space<vmem>>, %arg6: memref<128x256xf32, #tpu.memory_space<vmem>>, %arg7: memref<1x256xf32, #tpu.memory_space<vmem>>, %arg8: memref<128x256xf32, #tpu.memory_space<vmem>>) attributes {dimension_semantics = [#tpu.dimension_semantics<parallel>], iteration_bounds = array<i64: 2>, scalar_prefetch = 0 : i64, scratch_operands = 0 : i64, tpu.core_type = #tpu.core_type<tc>, window_params = [{transform_indices = @transform_0, window_bounds = array<i64: 128, 4>}, {pipeline_mode = #tpu.pipeline_mode<synchronous>, transform_indices = @transform_1, window_bounds = array<i64: 4, 256>}, {pipeline_mode = #tpu.pipeline_mode<synchronous>, transform_indices = @transform_2, window_bounds = array<i64: 1, 256>}, {pipeline_mode = #tpu.pipeline_mode<synchronous>, transform_indices = @transform_3, window_bounds = array<i64: 256, 128>}, {pipeline_mode = #tpu.pipeline_mode<synchronous>, transform_indices = @transform_4, window_bounds = array<i64: 1, 128>}, {pipeline_mode = #tpu.pipeline_mode<synchronous>, transform_indices = @transform_5, window_bounds = array<i64: 128, 256>}, {pipeline_mode = #tpu.pipeline_mode<synchronous>, transform_indices = @transform_6, window_bounds = array<i64: 1, 256>}, {transform_indices = @transform_7, window_bounds = array<i64: 128, 256>}]} {
    %c0 = arith.constant 0 : index
    %c0_0 = arith.constant 0 : index
    %0 = vector.load %arg1[%c0, %c0_0] : memref<128x4xf32, #tpu.memory_space<vmem>>, vector<128x4xf32>
    %c0_1 = arith.constant 0 : index
    %c0_2 = arith.constant 0 : index
    %1 = vector.load %arg2[%c0_1, %c0_2] : memref<4x256xf32, #tpu.memory_space<vmem>>, vector<4x256xf32>
    %cst = arith.constant dense<0.000000e+00> : vector<128x256xf32>
    %2 = tpu.matmul %0, %1, %cst {dimension_numbers = #tpu.dot_dimension_numbers<[1], [0], [0], [1], [0, 0, 1, 1], [], []>} : vector<128x4xf32>, vector<4x256xf32>, vector<128x256xf32> -> vector<128x256xf32>
    %c0_3 = arith.constant 0 : index
    %c0_4 = arith.constant 0 : index
    %3 = vector.load %arg3[%c0_3, %c0_4] : memref<1x256xf32, #tpu.memory_space<vmem>>, vector<1x256xf32>
    %4 = vector.broadcast %3 : vector<1x256xf32> to vector<128x256xf32>
    %5 = arith.addf %2, %4 : vector<128x256xf32>
    %cst_5 = arith.constant 0.000000e+00 : f32
    %6 = vector.broadcast %cst_5 : f32 to vector<128x256xf32>
    %7 = arith.maximumf %5, %6 : vector<128x256xf32>
    %c0_6 = arith.constant 0 : index
    %c0_7 = arith.constant 0 : index
    %8 = vector.load %arg4[%c0_6, %c0_7] : memref<256x128xf32, #tpu.memory_space<vmem>>, vector<256x128xf32>
    %cst_8 = arith.constant dense<0.000000e+00> : vector<128x128xf32>
    %9 = tpu.matmul %7, %8, %cst_8 {dimension_numbers = #tpu.dot_dimension_numbers<[1], [0], [0], [1], [0, 0, 1, 1], [], []>} : vector<128x256xf32>, vector<256x128xf32>, vector<128x128xf32> -> vector<128x128xf32>
    %c0_9 = arith.constant 0 : index
    %c0_10 = arith.constant 0 : index
    %10 = vector.load %arg5[%c0_9, %c0_10] : memref<1x128xf32, #tpu.memory_space<vmem>>, vector<1x128xf32>
    %11 = vector.broadcast %10 : vector<1x128xf32> to vector<128x128xf32>
    %12 = arith.addf %9, %11 : vector<128x128xf32>
    %cst_11 = arith.constant 0.000000e+00 : f32
    %13 = vector.broadcast %cst_11 : f32 to vector<128x128xf32>
    %14 = arith.maximumf %12, %13 : vector<128x128xf32>
    %c0_12 = arith.constant 0 : index
    %c0_13 = arith.constant 0 : index
    %15 = vector.load %arg6[%c0_12, %c0_13] : memref<128x256xf32, #tpu.memory_space<vmem>>, vector<128x256xf32>
    %cst_14 = arith.constant dense<0.000000e+00> : vector<128x256xf32>
    %16 = tpu.matmul %14, %15, %cst_14 {dimension_numbers = #tpu.dot_dimension_numbers<[1], [0], [0], [1], [0, 0, 1, 1], [], []>} : vector<128x128xf32>, vector<128x256xf32>, vector<128x256xf32> -> vector<128x256xf32>
    %c0_15 = arith.constant 0 : index
    %c0_16 = arith.constant 0 : index
    %17 = vector.load %arg7[%c0_15, %c0_16] : memref<1x256xf32, #tpu.memory_space<vmem>>, vector<1x256xf32>
    %18 = vector.broadcast %17 : vector<1x256xf32> to vector<128x256xf32>
    %19 = arith.addf %16, %18 : vector<128x256xf32>
    %c0_17 = arith.constant 0 : index
    %c0_18 = arith.constant 0 : index
    %20 = vector.load %arg8[%c0_17, %c0_18] : memref<128x256xf32, #tpu.memory_space<vmem>>, vector<128x256xf32>
    tpu.vector_store %arg8[%c0_17, %c0_18], %19 {strides = array<i32>} : memref<128x256xf32, #tpu.memory_space<vmem>>, vector<128x256xf32>,
    return
  }
  func.func @transform_0(%arg0: i32) -> (i32, i32) {
    %c0_i32 = arith.constant 0 : i32
    %c0_i32_0 = arith.constant 0 : i32
    return %arg0, %c0_i32 : i32, i32
  }
  func.func @transform_1(%arg0: i32) -> (i32, i32) {
    %c0_i32 = arith.constant 0 : i32
    %c0_i32_0 = arith.constant 0 : i32
    %c0_i32_1 = arith.constant 0 : i32
    return %c0_i32, %c0_i32_0 : i32, i32
  }
  func.func @transform_2(%arg0: i32) -> (i32, i32) {
    %c0_i32 = arith.constant 0 : i32
    %c0_i32_0 = arith.constant 0 : i32
    %c0_i32_1 = arith.constant 0 : i32
    return %c0_i32, %c0_i32_0 : i32, i32
  }
  func.func @transform_3(%arg0: i32) -> (i32, i32) {
    %c0_i32 = arith.constant 0 : i32
    %c0_i32_0 = arith.constant 0 : i32
    %c0_i32_1 = arith.constant 0 : i32
    return %c0_i32, %c0_i32_0 : i32, i32
  }
  func.func @transform_4(%arg0: i32) -> (i32, i32) {
    %c0_i32 = arith.constant 0 : i32
    %c0_i32_0 = arith.constant 0 : i32
    %c0_i32_1 = arith.constant 0 : i32
    return %c0_i32, %c0_i32_0 : i32, i32
  }
  func.func @transform_5(%arg0: i32) -> (i32, i32) {
    %c0_i32 = arith.constant 0 : i32
    %c0_i32_0 = arith.constant 0 : i32
    %c0_i32_1 = arith.constant 0 : i32
    return %c0_i32, %c0_i32_0 : i32, i32
  }
  func.func @transform_6(%arg0: i32) -> (i32, i32) {
    %c0_i32 = arith.constant 0 : i32
    %c0_i32_0 = arith.constant 0 : i32
    %c0_i32_1 = arith.constant 0 : i32
    return %c0_i32, %c0_i32_0 : i32, i32
  }
  func.func @transform_7(%arg0: i32) -> (i32, i32) {
    %c0_i32 = arith.constant 0 : i32
    %c0_i32_0 = arith.constant 0 : i32
    return %arg0, %c0_i32 : i32, i32
  }
}

</mosaic_0001>

<llo_original>
// kernel: _mlp_forward.1
$region0: #{_mlp_forward.1}
  #allocation0 [shape = 'u32[]', space=smem, size = 0x4, offset = 0x4, fixed_abs, tag = 'smem constant byte address 0x4 - core index']
  #allocation1 [shape = 'u32[144,128]{1,0:T(1,128)}', space=vmem, size = 0x12000, scoped, tag = 'internal scratch']
  %s0 = inlined_call_operand.vmem [shape: f32[256,4], index: 0, kind: input, shape index: {}]
  %s1 = inlined_call_operand.vmem [shape: f32[4,256], index: 1, kind: input, shape index: {}]
  %s2 = inlined_call_operand.vmem [shape: f32[1,256], index: 2, kind: input, shape index: {}]
  %s3 = inlined_call_operand.vmem [shape: f32[256,128], index: 3, kind: input, shape index: {}]
  %s4 = inlined_call_operand.vmem [shape: f32[1,128], index: 4, kind: input, shape index: {}]
  %s5 = inlined_call_operand.vmem [shape: f32[128,256], index: 5, kind: input, shape index: {}]
  %s6 = inlined_call_operand.vmem [shape: f32[1,256], index: 6, kind: input, shape index: {}]
  %s7 = inlined_call_operand.vmem [shape: f32[256,256], index: 7, kind: output, shape index: {}]
  %s8 = sld [smem:[#allocation0]]
  $region61: #{_mlp_forward.1} parent=0
    _
  %s10 = ssub.s32 1, %s8
  %s11 = scalar_select 0, %s10, %s8
  loop: start=0, step=1, limit=4
  $region2: #{_mlp_forward.1} parent=0 // loop_pre_header
    _
  $region3: #{_mlp_forward.1} parent=0 // loop_header
    %s13 = sphi 0, %s17
    %p14 = scmp.ge.s32.totalorder %s13, 4
    %s23 = sphi 0, %s25
    %s26 = sphi 0, %s23
    %s27 = sphi 0, %s26
    %s43 = sphi 0, %s27
    %s47 = sphi 0, %s47
    %s49 = sphi 0, %s47
    %s50 = sphi 0, %s49
    %s64 = sphi 0, %s50
    %s68 = sphi 0, %s68
    %s70 = sphi 0, %s68
    %s71 = sphi 0, %s70
    %s85 = sphi 0, %s71
    %s89 = sphi 0, %s89
    %s91 = sphi 0, %s89
    %s92 = sphi 0, %s91
    %s106 = sphi 0, %s92
    %s110 = sphi 0, %s110
    %s112 = sphi 0, %s110
    %s113 = sphi 0, %s112
    %s127 = sphi 0, %s113
    %s131 = sphi 0, %s131
    %s133 = sphi 0, %s131
    %s134 = sphi 0, %s133
    %s148 = sphi 0, %s134
    %s152 = sphi 0, %s152
    %s154 = sphi 0, %s152
    %s155 = sphi 0, %s154
    %s169 = sphi 0, %s155
    %s175 = sphi 0, %s177
    %s178 = sphi 0, %s175
    %s179 = sphi 0, %s178
    %s195 = sphi 0, %s179
  $region4: #{_mlp_forward.1} parent=0 // loop_header_branch
    %16 = sbr.rel (%p14) target = $region8
  $region5: #{_mlp_forward.1} parent=0 // loop_body
    %s18 = ssub.s32 %s13, 1
    %s19 = ssub.s32 %s13, 2
    %s20 = sadd.s32 %s13, 1
    %s21 = ssub.s32 %s13, %s20
    %p22 = scmp.eq.s32.totalorder %s21, 0
    %s24 = sadd.s32 %s23, 1
    %s25 = scalar_select %p22, %s23, %s24
    %p28 = pneg %p22
    %p29 = scmp.eq.s32.totalorder %s13, 1
    %p30 = por %p28, %p29
    %p31 = scmp.ne.s32.totalorder %s23, %s26
    %p32 = scmp.eq.s32.totalorder %s13, 0
    %p33 = por %p31, %p32
    %p34 = scmp.ne.s32.totalorder %s23, %s26
    %p35 = scmp.eq.s32.totalorder %s18, 1
    %p36 = por %p34, %p35
    %p37 = scmp.ne.s32.totalorder %s26, %s27
    %p38 = scmp.eq.s32.totalorder %s18, 0
    %p39 = por %p37, %p38
    %p40 = scmp.ne.s32.totalorder %s26, %s27
    %p41 = scmp.eq.s32.totalorder %s19, 1
    %p42 = por %p40, %p41
    %p44 = scmp.ne.s32.totalorder %s27, %s43
    %p45 = scmp.eq.s32.totalorder %s19, 0
    %p46 = por %p44, %p45
    %s48 = sadd.s32 %s47, 1
    %p51 = scmp.eq.s32.totalorder %s13, 1
    %p52 = scmp.ne.s32.totalorder %s47, %s49
    %p53 = scmp.eq.s32.totalorder %s13, 0
    %p54 = por %p52, %p53
    %p55 = scmp.ne.s32.totalorder %s47, %s49
    %p56 = scmp.eq.s32.totalorder %s18, 1
    %p57 = por %p55, %p56
    %p58 = scmp.ne.s32.totalorder %s49, %s50
    %p59 = scmp.eq.s32.totalorder %s18, 0
    %p60 = por %p58, %p59
    %p61 = scmp.ne.s32.totalorder %s49, %s50
    %p62 = scmp.eq.s32.totalorder %s19, 1
    %p63 = por %p61, %p62
    %p65 = scmp.ne.s32.totalorder %s50, %s64
    %p66 = scmp.eq.s32.totalorder %s19, 0
    %p67 = por %p65, %p66
    %s69 = sadd.s32 %s68, 1
    %p72 = scmp.eq.s32.totalorder %s13, 1
    %p73 = scmp.ne.s32.totalorder %s68, %s70
    %p74 = scmp.eq.s32.totalorder %s13, 0
    %p75 = por %p73, %p74
    %p76 = scmp.ne.s32.totalorder %s68, %s70
    %p77 = scmp.eq.s32.totalorder %s18, 1
    %p78 = por %p76, %p77
    %p79 = scmp.ne.s32.totalorder %s70, %s71
    %p80 = scmp.eq.s32.totalorder %s18, 0
    %p81 = por %p79, %p80
    %p82 = scmp.ne.s32.totalorder %s70, %s71
    %p83 = scmp.eq.s32.totalorder %s19, 1
    %p84 = por %p82, %p83
    %p86 = scmp.ne.s32.totalorder %s71, %s85
    %p87 = scmp.eq.s32.totalorder %s19, 0
    %p88 = por %p86, %p87
    %s90 = sadd.s32 %s89, 1
    %p93 = scmp.eq.s32.totalorder %s13, 1
    %p94 = scmp.ne.s32.totalorder %s89, %s91
    %p95 = scmp.eq.s32.totalorder %s13, 0
    %p96 = por %p94, %p95
    %p97 = scmp.ne.s32.totalorder %s89, %s91
    %p98 = scmp.eq.s32.totalorder %s18, 1
    %p99 = por %p97, %p98
    %p100 = scmp.ne.s32.totalorder %s91, %s92
    %p101 = scmp.eq.s32.totalorder %s18, 0
    %p102 = por %p100, %p101
    %p103 = scmp.ne.s32.totalorder %s91, %s92
    %p104 = scmp.eq.s32.totalorder %s19, 1
    %p105 = por %p103, %p104
    %p107 = scmp.ne.s32.totalorder %s92, %s106
    %p108 = scmp.eq.s32.totalorder %s19, 0
    %p109 = por %p107, %p108
    %s111 = sadd.s32 %s110, 1
    %p114 = scmp.eq.s32.totalorder %s13, 1
    %p115 = scmp.ne.s32.totalorder %s110, %s112
    %p116 = scmp.eq.s32.totalorder %s13, 0
    %p117 = por %p115, %p116
    %p118 = scmp.ne.s32.totalorder %s110, %s112
    %p119 = scmp.eq.s32.totalorder %s18, 1
    %p120 = por %p118, %p119
    %p121 = scmp.ne.s32.totalorder %s112, %s113
    %p122 = scmp.eq.s32.totalorder %s18, 0
    %p123 = por %p121, %p122
    %p124 = scmp.ne.s32.totalorder %s112, %s113
    %p125 = scmp.eq.s32.totalorder %s19, 1
    %p126 = por %p124, %p125
    %p128 = scmp.ne.s32.totalorder %s113, %s127
    %p129 = scmp.eq.s32.totalorder %s19, 0
    %p130 = por %p128, %p129
    %s132 = sadd.s32 %s131, 1
    %p135 = scmp.eq.s32.totalorder %s13, 1
    %p136 = scmp.ne.s32.totalorder %s131, %s133
    %p137 = scmp.eq.s32.totalorder %s13, 0
    %p138 = por %p136, %p137
    %p139 = scmp.ne.s32.totalorder %s131, %s133
    %p140 = scmp.eq.s32.totalorder %s18, 1
    %p141 = por %p139, %p140
    %p142 = scmp.ne.s32.totalorder %s133, %s134
    %p143 = scmp.eq.s32.totalorder %s18, 0
    %p144 = por %p142, %p143
    %p145 = scmp.ne.s32.totalorder %s133, %s134
    %p146 = scmp.eq.s32.totalorder %s19, 1
    %p147 = por %p145, %p146
    %p149 = scmp.ne.s32.totalorder %s134, %s148
    %p150 = scmp.eq.s32.totalorder %s19, 0
    %p151 = por %p149, %p150
    %s153 = sadd.s32 %s152, 1
    %p156 = scmp.eq.s32.totalorder %s13, 1
    %p157 = scmp.ne.s32.totalorder %s152, %s154
    %p158 = scmp.eq.s32.totalorder %s13, 0
    %p159 = por %p157, %p158
    %p160 = scmp.ne.s32.totalorder %s152, %s154
    %p161 = scmp.eq.s32.totalorder %s18, 1
    %p162 = por %p160, %p161
    %p163 = scmp.ne.s32.totalorder %s154, %s155
    %p164 = scmp.eq.s32.totalorder %s18, 0
    %p165 = por %p163, %p164
    %p166 = scmp.ne.s32.totalorder %s154, %s155
    %p167 = scmp.eq.s32.totalorder %s19, 1
    %p168 = por %p166, %p167
    %p170 = scmp.ne.s32.totalorder %s155, %s169
    %p171 = scmp.eq.s32.totalorder %s19, 0
    %p172 = por %p170, %p171
    %s173 = ssub.s32 %s13, %s20
    %p174 = scmp.eq.s32.totalorder %s173, 0
    %s176 = sadd.s32 %s175, 1
    %s177 = scalar_select %p174, %s175, %s176
    %p180 = pneg %p174
    %p181 = scmp.eq.s32.totalorder %s13, 1
    %p182 = por %p180, %p181
    %p183 = scmp.ne.s32.totalorder %s175, %s178
    %p184 = scmp.eq.s32.totalorder %s13, 0
    %p185 = por %p183, %p184
    %p186 = scmp.ne.s32.totalorder %s175, %s178
    %p187 = scmp.eq.s32.totalorder %s18, 1
    %p188 = por %p186, %p187
    %p189 = scmp.ne.s32.totalorder %s178, %s179
    %p190 = scmp.eq.s32.totalorder %s18, 0
    %p191 = por %p189, %p190
    %p192 = scmp.ne.s32.totalorder %s178, %s179
    %p193 = scmp.eq.s32.totalorder %s19, 1
    %p194 = por %p192, %p193
    %p196 = scmp.ne.s32.totalorder %s179, %s195
    %p197 = scmp.eq.s32.totalorder %s19, 0
    %p198 = por %p196, %p197
    %p199 = scmp.le.s32.totalorder 1, %s13
    %p200 = scmp.lt.s32.totalorder %s13, 3
    %p201 = pnand %p199, %p200
    %p202 = pneg %p201
    // Predicated region
    $region9: #{_mlp_forward.1} parent=5 // pred_check
      _
    $region10: #{_mlp_forward.1} parent=5 // pred_check_branch
      %204 = sbr.rel (%p201) target = $region12
    $region11: #{_mlp_forward.1} parent=5 // pred_region
      %s205 = ssub.s32 %s13, 1
      // Predicated region
      $region13: #{_mlp_forward.1} parent=11 // pred_check
        %p206 = pneg %p60
      $region14: #{_mlp_forward.1} parent=11 // pred_check_branch
        %208 = sbr.rel (%p206) target = $region16
      $region15: #{_mlp_forward.1} parent=11 // pred_region
        _
      $region16: #{_mlp_forward.1} parent=11 // pred_fallthru
        _
      // Predicated region
      $region17: #{_mlp_forward.1} parent=11 // pred_check
        %p209 = pneg %p81
      $region18: #{_mlp_forward.1} parent=11 // pred_check_branch
        %211 = sbr.rel (%p209) target = $region20
      $region19: #{_mlp_forward.1} parent=11 // pred_region
        _
      $region20: #{_mlp_forward.1} parent=11 // pred_fallthru
        _
      // Predicated region
      $region21: #{_mlp_forward.1} parent=11 // pred_check
        %p212 = pneg %p102
      $region22: #{_mlp_forward.1} parent=11 // pred_check_branch
        %214 = sbr.rel (%p212) target = $region24
      $region23: #{_mlp_forward.1} parent=11 // pred_region
        _
      $region24: #{_mlp_forward.1} parent=11 // pred_fallthru
        _
      // Predicated region
      $region25: #{_mlp_forward.1} parent=11 // pred_check
        %p215 = pneg %p123
      $region26: #{_mlp_forward.1} parent=11 // pred_check_branch
        %217 = sbr.rel (%p215) target = $region28
      $region27: #{_mlp_forward.1} parent=11 // pred_region
        _
      $region28: #{_mlp_forward.1} parent=11 // pred_fallthru
        _
      // Predicated region
      $region29: #{_mlp_forward.1} parent=11 // pred_check
        %p218 = pneg %p144
      $region30: #{_mlp_forward.1} parent=11 // pred_check_branch
        %220 = sbr.rel (%p218) target = $region32
      $region31: #{_mlp_forward.1} parent=11 // pred_region
        _
      $region32: #{_mlp_forward.1} parent=11 // pred_fallthru
        _
      // Predicated region
      $region33: #{_mlp_forward.1} parent=11 // pred_check
        %p221 = pneg %p165
      $region34: #{_mlp_forward.1} parent=11 // pred_check_branch
        %223 = sbr.rel (%p221) target = $region36
      $region35: #{_mlp_forward.1} parent=11 // pred_region
        _
      $region36: #{_mlp_forward.1} parent=11 // pred_fallthru
        _
    $region12: #{_mlp_forward.1} parent=5 // pred_fallthru
      _
    %p224 = scmp.lt.s32.totalorder %s13, 2
    // Predicated region
    $region37: #{_mlp_forward.1} parent=5 // pred_check
      %p225 = pneg %p224
    $region38: #{_mlp_forward.1} parent=5 // pred_check_branch
      %227 = sbr.rel (%p225) target = $region40
    $region39: #{_mlp_forward.1} parent=5 // pred_region
      // Predicated region
      $region41: #{_mlp_forward.1} parent=39 // pred_check
        %p228 = pneg %p33
      $region42: #{_mlp_forward.1} parent=39 // pred_check_branch
        %230 = sbr.rel (%p228) target = $region44
      $region43: #{_mlp_forward.1} parent=39 // pred_region
        %s231 = smul.u32 16, %s13
        %p232 = scmp.lt.s32.totalorder %s231, 31
        %s233 = scalar_select %p232, %s231, 31
        %s234 = smul.addr %s233, 8
        %s235 = scalar_lea.vmem %s0, %s234
        %s236 = smul.u32 16, %s13
      $region44: #{_mlp_forward.1} parent=39 // pred_fallthru
        _
    $region40: #{_mlp_forward.1} parent=5 // pred_fallthru
      _
    %p237 = scmp.le.s32.totalorder 1, %s13
    %p238 = scmp.lt.s32.totalorder %s13, 3
    %p239 = pnand %p237, %p238
    %p240 = pneg %p239
    // Predicated region
    $region45: #{_mlp_forward.1} parent=5 // pred_check
      _
    $region46: #{_mlp_forward.1} parent=5 // pred_check_branch
      %242 = sbr.rel (%p239) target = $region48
    $region47: #{_mlp_forward.1} parent=5 // pred_region
      %s243 = ssub.s32 %s13, 1
      %s244 = smul.u32 16, %s18
      %p245 = scmp.lt.s32.totalorder %s244, 31
      %s246 = scalar_select %p245, %s244, 31
      %s247 = smul.addr %s246, 8
      %s248 = scalar_lea.vmem %s0, %s247
      %p249 = pneg %p39
      %p250 = pneg %p36
      %p251 = pneg %p60
      %p252 = pneg %p57
      %p253 = pneg %p81
      %p254 = pneg %p78
      %p255 = pneg %p102
      %p256 = pneg %p99
      %p257 = pneg %p123
      %p258 = pneg %p120
      %p259 = pneg %p144
      %p260 = pneg %p141
      %p261 = pneg %p165
      %p262 = pneg %p162
      %p263 = pneg %p191
      %p264 = pneg %p188
      %s265 = smul.u32 16, %s18
      %p266 = scmp.lt.s32.totalorder %s265, 31
      %s267 = scalar_select %p266, %s265, 31
      %s268 = smul.addr %s267, 2
      %s269 = smul.addr %s268, 8
      %s270 = scalar_lea.vmem %s7, %s269
      %s271 = smul.u32 16, %s18
      %p272 = scmp.lt.s32.totalorder %s271, 31
      %s273 = scalar_select %p272, %s271, 31
      %s274 = smul.addr %s273, 8
      %s275 = scalar_lea.vmem %s0, %s274
      %s276 = smul.u32 16, %s18
      %s277 = smul.u32 16, %s18
      %p278 = scmp.lt.s32.totalorder %s277, 31
      %s279 = scalar_select %p278, %s277, 31
      %s280 = smul.addr %s279, 2
      %s281 = smul.addr %s280, 8
      %s282 = scalar_lea.vmem %s7, %s281
      %s283 = smul.u32 16, %s18
      %v284 = vld [vmem:[%s275] sm:$0xff]
      %v285 = vld [vmem:[%s275 + $0x8] sm:$0xff]
      %v286 = vld [vmem:[%s275 + $0x10] sm:$0xff]
      %v287 = vld [vmem:[%s275 + $0x18] sm:$0xff]
      %v288 = vld [vmem:[%s275 + $0x20] sm:$0xff]
      %v289 = vld [vmem:[%s275 + $0x28] sm:$0xff]
      %v290 = vld [vmem:[%s275 + $0x30] sm:$0xff]
      %v291 = vld [vmem:[%s275 + $0x38] sm:$0xff]
      %v292 = vld [vmem:[%s275 + $0x40] sm:$0xff]
      %v293 = vld [vmem:[%s275 + $0x48] sm:$0xff]
      %v294 = vld [vmem:[%s275 + $0x50] sm:$0xff]
      %v295 = vld [vmem:[%s275 + $0x58] sm:$0xff]
      %v296 = vld [vmem:[%s275 + $0x60] sm:$0xff]
      %v297 = vld [vmem:[%s275 + $0x68] sm:$0xff]
      %v298 = vld [vmem:[%s275 + $0x70] sm:$0xff]
      %v299 = vld [vmem:[%s275 + $0x78] sm:$0xff]
      %v300 = vld [vmem:[%s1] sm:$0xff]
      %v301 = vld [vmem:[%s2] sm:$0x3]
      %v303 = vlaneseq
      %v304 = vshrl.u32 %v303, 7
      %v305 = vsub.s32 0, %v304
      %v306 = vrot.slane %v301, %v305
      %v307 = vlaneseq
      %v308 = vshrl.u32 %v307, 7
      %v309 = vsub.s32 1, %v308
      %v310 = vrot.slane %v301, %v309
      %v314 = vcombine.high %v300, %v300
      %vm315 = vcmask 31744
      %v317 = vsel %vm315, %v284, 0
      %v320 = vsel %vm315, %v285, 0
      %v323 = vsel %vm315, %v286, 0
      %v326 = vsel %vm315, %v287, 0
      %v329 = vsel %vm315, %v288, 0
      %v332 = vsel %vm315, %v289, 0
      %v335 = vsel %vm315, %v290, 0
      %v338 = vsel %vm315, %v291, 0
      %v341 = vsel %vm315, %v292, 0
      %v344 = vsel %vm315, %v293, 0
      %v347 = vsel %vm315, %v294, 0
      %v350 = vsel %vm315, %v295, 0
      %v353 = vsel %vm315, %v296, 0
      %v356 = vsel %vm315, %v297, 0
      %v359 = vsel %vm315, %v298, 0
      %v362 = vsel %vm315, %v299, 0
      %vm364 = vcmask 1043456
      %v365 = vsel %vm364, %v300, 0
      %v367 = vsel %vm364, %v314, 0
      %369 = vmatprep.subr.mxu0 0.0
      %370 = vmatpush1.msra.mxu0 0.0
      %371 = vmatprep.subr.mxu0 0.0
      %372 = vmatpush1.msra.mxu0 0.0
      %373 = vmatprep.subr.mxu0 0.0
      %374 = vmatpush1.msra.mxu0 0.0
      %375 = vmatprep.subr.mxu0 0.0
      %376 = vmatpush1.msra.mxu0 0.0
      %377 = vmatprep.subr.mxu0 0.0
      %378 = vmatpush1.msra.mxu0 0.0
      %379 = vmatprep.subr.mxu0 0.0
      %380 = vmatpush1.msra.mxu0 0.0
      %381 = vmatprep.subr.mxu0 0.0
      %382 = vmatpush1.msra.mxu0 0.0
      %383 = vmatprep.subr.mxu0 0.0
      %384 = vmatpush1.msra.mxu0 0.0
      %385 = vmatprep.subr.mxu0 0.0
      %386 = vmatpush1.msra.mxu0 0.0
      %387 = vmatprep.subr.mxu0 0.0
      %388 = vmatpush1.msra.mxu0 0.0
      %389 = vmatprep.subr.mxu0 0.0
      %390 = vmatpush1.msra.mxu0 0.0
      %391 = vmatprep.subr.mxu0 0.0
      %392 = vmatpush1.msra.mxu0 0.0
      %393 = vmatprep.subr.mxu0 0.0
      %394 = vmatpush1.msra.mxu0 0.0
      %395 = vmatprep.subr.mxu0 0.0
      %396 = vmatpush1.msra.mxu0 0.0
      %397 = vmatprep.subr.mxu0 0.0
      %398 = vmatpush1.msra.mxu0 0.0
      %399 = vmatprep.subr.mxu0 %v367
      %400 = vmatpush1.msra.mxu0 %v365
      %401 = vmatprep.subr.mxu0 0.0
      %402 = vmatpush2.msra.mxu0 0.0
      %403 = vmatprep.subr.mxu0 0.0
      %404 = vmatpush2.msra.mxu0 0.0
      %405 = vmatprep.subr.mxu0 0.0
      %406 = vmatpush2.msra.mxu0 0.0
      %407 = vmatprep.subr.mxu0 0.0
      %408 = vmatpush2.msra.mxu0 0.0
      %409 = vmatprep.subr.mxu0 0.0
      %410 = vmatpush2.msra.mxu0 0.0
      %411 = vmatprep.subr.mxu0 0.0
      %412 = vmatpush2.msra.mxu0 0.0
      %413 = vmatprep.subr.mxu0 0.0
      %414 = vmatpush2.msra.mxu0 0.0
      %415 = vmatprep.subr.mxu0 0.0
      %416 = vmatpush2.msra.mxu0 0.0
      %417 = vmatprep.subr.mxu0 0.0
      %418 = vmatpush2.msra.mxu0 0.0
      %419 = vmatprep.subr.mxu0 0.0
      %420 = vmatpush2.msra.mxu0 0.0
      %421 = vmatprep.subr.mxu0 0.0
      %422 = vmatpush2.msra.mxu0 0.0
      %423 = vmatprep.subr.mxu0 0.0
      %424 = vmatpush2.msra.mxu0 0.0
      %425 = vmatprep.subr.mxu0 0.0
      %426 = vmatpush2.msra.mxu0 0.0
      %427 = vmatprep.subr.mxu0 0.0
      %428 = vmatpush2.msra.mxu0 0.0
      %429 = vmatprep.subr.mxu0 0.0
      %430 = vmatpush2.msra.mxu0 0.0
      %431 = vmatprep.subr.mxu0 0.0
      %432 = vmatpush2.msra.mxu0 0.0
      %433 = vmatprep.mubr.f32.mxu0 0.0
      %434 = vmatmul.mubr.f32.gmra.mxu0 %v317
      %v435 = vpop.f32.mrf.mxu0
      %v436 = vadd.f32 %v306, %v435
      %v437 = vpop.f32.mrf.mxu0
      %v438 = vadd.f32 %v310, %v437
      %439 = vmatprep.mubr.f32.mxu0 0.0
      %440 = vmatmul.mubr.f32.gmra.mxu0 %v320
      %v441 = vpop.f32.mrf.mxu0
      %v442 = vadd.f32 %v306, %v441
      %v443 = vpop.f32.mrf.mxu0
      %v444 = vadd.f32 %v310, %v443
      %445 = vmatprep.mubr.f32.mxu0 0.0
      %446 = vmatmul.mubr.f32.gmra.mxu0 %v323
      %v447 = vpop.f32.mrf.mxu0
      %v448 = vadd.f32 %v306, %v447
      %v449 = vpop.f32.mrf.mxu0
      %v450 = vadd.f32 %v310, %v449
      %451 = vmatprep.mubr.f32.mxu0 0.0
      %452 = vmatmul.mubr.f32.gmra.mxu0 %v326
      %v453 = vpop.f32.mrf.mxu0
      %v454 = vadd.f32 %v306, %v453
      %v455 = vpop.f32.mrf.mxu0
      %v456 = vadd.f32 %v310, %v455
      %457 = vmatprep.mubr.f32.mxu0 0.0
      %458 = vmatmul.mubr.f32.gmra.mxu0 %v329
      %v459 = vpop.f32.mrf.mxu0
      %v460 = vadd.f32 %v306, %v459
      %v461 = vpop.f32.mrf.mxu0
      %v462 = vadd.f32 %v310, %v461
      %463 = vmatprep.mubr.f32.mxu0 0.0
      %464 = vmatmul.mubr.f32.gmra.mxu0 %v332
      %v465 = vpop.f32.mrf.mxu0
      %v466 = vadd.f32 %v306, %v465
      %v467 = vpop.f32.mrf.mxu0
      %v468 = vadd.f32 %v310, %v467
      %469 = vmatprep.mubr.f32.mxu0 0.0
      %470 = vmatmul.mubr.f32.gmra.mxu0 %v335
      %v471 = vpop.f32.mrf.mxu0
      %v472 = vadd.f32 %v306, %v471
      %v473 = vpop.f32.mrf.mxu0
      %v474 = vadd.f32 %v310, %v473
      %475 = vmatprep.mubr.f32.mxu0 0.0
      %476 = vmatmul.mubr.f32.gmra.mxu0 %v338
      %v477 = vpop.f32.mrf.mxu0
      %v478 = vadd.f32 %v306, %v477
      %v479 = vpop.f32.mrf.mxu0
      %v480 = vadd.f32 %v310, %v479
      %481 = vmatprep.mubr.f32.mxu0 0.0
      %482 = vmatmul.mubr.f32.gmra.mxu0 %v341
      %v483 = vpop.f32.mrf.mxu0
      %v484 = vadd.f32 %v306, %v483
      %v485 = vpop.f32.mrf.mxu0
      %v486 = vadd.f32 %v310, %v485
      %487 = vmatprep.mubr.f32.mxu0 0.0
      %488 = vmatmul.mubr.f32.gmra.mxu0 %v344
      %v489 = vpop.f32.mrf.mxu0
      %v490 = vadd.f32 %v306, %v489
      %v491 = vpop.f32.mrf.mxu0
      %v492 = vadd.f32 %v310, %v491
      %493 = vmatprep.mubr.f32.mxu0 0.0
      %494 = vmatmul.mubr.f32.gmra.mxu0 %v347
      %v495 = vpop.f32.mrf.mxu0
      %v496 = vadd.f32 %v306, %v495
      %v497 = vpop.f32.mrf.mxu0
      %v498 = vadd.f32 %v310, %v497
      %499 = vmatprep.mubr.f32.mxu0 0.0
      %500 = vmatmul.mubr.f32.gmra.mxu0 %v350
      %v501 = vpop.f32.mrf.mxu0
      %v502 = vadd.f32 %v306, %v501
      %v503 = vpop.f32.mrf.mxu0
      %v504 = vadd.f32 %v310, %v503
      %505 = vmatprep.mubr.f32.mxu0 0.0
      %506 = vmatmul.mubr.f32.gmra.mxu0 %v353
      %v507 = vpop.f32.mrf.mxu0
      %v508 = vadd.f32 %v306, %v507
      %v509 = vpop.f32.mrf.mxu0
      %v510 = vadd.f32 %v310, %v509
      %511 = vmatprep.mubr.f32.mxu0 0.0
      %512 = vmatmul.mubr.f32.gmra.mxu0 %v356
      %v513 = vpop.f32.mrf.mxu0
      %v514 = vadd.f32 %v306, %v513
      %v515 = vpop.f32.mrf.mxu0
      %v516 = vadd.f32 %v310, %v515
      %517 = vmatprep.mubr.f32.mxu0 0.0
      %518 = vmatmul.mubr.f32.gmra.mxu0 %v359
      %v519 = vpop.f32.mrf.mxu0
      %v520 = vadd.f32 %v306, %v519
      %v521 = vpop.f32.mrf.mxu0
      %v522 = vadd.f32 %v310, %v521
      %523 = vmatprep.mubr.f32.mxu0 0.0
      %524 = vmatmul.mubr.f32.gmra.mxu0 %v362
      %v525 = vpop.f32.mrf.mxu0
      %v526 = vadd.f32 %v306, %v525
      %v527 = vpop.f32.mrf.mxu0
      %v528 = vadd.f32 %v310, %v527
      %529 = vdwg.mxu0
      %v530 = vmax.f32 %v436, 0.0
      %v531 = vmax.f32 %v438, 0.0
      %v532 = vmax.f32 %v442, 0.0
      %v533 = vmax.f32 %v444, 0.0
      %v534 = vmax.f32 %v448, 0.0
      %v535 = vmax.f32 %v450, 0.0
      %v536 = vmax.f32 %v454, 0.0
      %v537 = vmax.f32 %v456, 0.0
      %v538 = vmax.f32 %v460, 0.0
      %v539 = vmax.f32 %v462, 0.0
      %v540 = vmax.f32 %v466, 0.0
      %v541 = vmax.f32 %v468, 0.0
      %v542 = vmax.f32 %v472, 0.0
      %v543 = vmax.f32 %v474, 0.0
      %v544 = vmax.f32 %v478, 0.0
      %v545 = vmax.f32 %v480, 0.0
      %v546 = vmax.f32 %v484, 0.0
      %v547 = vmax.f32 %v486, 0.0
      %v548 = vmax.f32 %v490, 0.0
      %v549 = vmax.f32 %v492, 0.0
      %v550 = vmax.f32 %v496, 0.0
      %v551 = vmax.f32 %v498, 0.0
      %v552 = vmax.f32 %v502, 0.0
      %v553 = vmax.f32 %v504, 0.0
      %v554 = vmax.f32 %v508, 0.0
      %v555 = vmax.f32 %v510, 0.0
      %v556 = vmax.f32 %v514, 0.0
      %v557 = vmax.f32 %v516, 0.0
      %v558 = vmax.f32 %v520, 0.0
      %v559 = vmax.f32 %v522, 0.0
      %v560 = vmax.f32 %v526, 0.0
      %v561 = vmax.f32 %v528, 0.0
      %v562 = vld [vmem:[%s3] sm:$0xff]
      %v563 = vld [vmem:[%s3 + $0x8] sm:$0xff]
      %v564 = vld [vmem:[%s3 + $0x10] sm:$0xff]
      %v565 = vld [vmem:[%s3 + $0x18] sm:$0xff]
      %v566 = vld [vmem:[%s3 + $0x20] sm:$0xff]
      %v567 = vld [vmem:[%s3 + $0x28] sm:$0xff]
      %v568 = vld [vmem:[%s3 + $0x30] sm:$0xff]
      %v569 = vld [vmem:[%s3 + $0x38] sm:$0xff]
      %v570 = vld [vmem:[%s3 + $0x40] sm:$0xff]
      %v571 = vld [vmem:[%s3 + $0x48] sm:$0xff]
      %v572 = vld [vmem:[%s3 + $0x50] sm:$0xff]
      %v573 = vld [vmem:[%s3 + $0x58] sm:$0xff]
      %v574 = vld [vmem:[%s3 + $0x60] sm:$0xff]
      %v575 = vld [vmem:[%s3 + $0x68] sm:$0xff]
      %v576 = vld [vmem:[%s3 + $0x70] sm:$0xff]
      %v577 = vld [vmem:[%s3 + $0x78] sm:$0xff]
      %v578 = vld [vmem:[%s3 + $0x80] sm:$0xff]
      %v579 = vld [vmem:[%s3 + $0x88] sm:$0xff]
      %v580 = vld [vmem:[%s3 + $0x90] sm:$0xff]
      %v581 = vld [vmem:[%s3 + $0x98] sm:$0xff]
      %v582 = vld [vmem:[%s3 + $0xa0] sm:$0xff]
      %v583 = vld [vmem:[%s3 + $0xa8] sm:$0xff]
      %v584 = vld [vmem:[%s3 + $0xb0] sm:$0xff]
      %v585 = vld [vmem:[%s3 + $0xb8] sm:$0xff]
      %v586 = vld [vmem:[%s3 + $0xc0] sm:$0xff]
      %v587 = vld [vmem:[%s3 + $0xc8] sm:$0xff]
      %v588 = vld [vmem:[%s3 + $0xd0] sm:$0xff]
      %v589 = vld [vmem:[%s3 + $0xd8] sm:$0xff]
      %v590 = vld [vmem:[%s3 + $0xe0] sm:$0xff]
      %v591 = vld [vmem:[%s3 + $0xe8] sm:$0xff]
      %v592 = vld [vmem:[%s3 + $0xf0] sm:$0xff]
      %v593 = vld [vmem:[%s3 + $0xf8] sm:$0xff]
      %v594 = vld [vmem:[%s4] sm:$0x1]
      %v596 = vlaneseq
      %v597 = vshrl.u32 %v596, 7
      %v598 = vsub.s32 0, %v597
      %v599 = vrot.slane %v594, %v598
      %601 = vmatprep.subr.mxu0 0.0
      %602 = vmatpush1.msra.mxu0 %v577
      %603 = vmatprep.subr.mxu0 0.0
      %604 = vmatpush1.msra.mxu0 %v576
      %605 = vmatprep.subr.mxu0 0.0
      %606 = vmatpush1.msra.mxu0 %v575
      %607 = vmatprep.subr.mxu0 0.0
      %608 = vmatpush1.msra.mxu0 %v574
      %609 = vmatprep.subr.mxu0 0.0
      %610 = vmatpush1.msra.mxu0 %v573
      %611 = vmatprep.subr.mxu0 0.0
      %612 = vmatpush1.msra.mxu0 %v572
      %613 = vmatprep.subr.mxu0 0.0
      %614 = vmatpush1.msra.mxu0 %v571
      %615 = vmatprep.subr.mxu0 0.0
      %616 = vmatpush1.msra.mxu0 %v570
      %617 = vmatprep.subr.mxu0 0.0
      %618 = vmatpush1.msra.mxu0 %v569
      %619 = vmatprep.subr.mxu0 0.0
      %620 = vmatpush1.msra.mxu0 %v568
      %621 = vmatprep.subr.mxu0 0.0
      %622 = vmatpush1.msra.mxu0 %v567
      %623 = vmatprep.subr.mxu0 0.0
      %624 = vmatpush1.msra.mxu0 %v566
      %625 = vmatprep.subr.mxu0 0.0
      %626 = vmatpush1.msra.mxu0 %v565
      %627 = vmatprep.subr.mxu0 0.0
      %628 = vmatpush1.msra.mxu0 %v564
      %629 = vmatprep.subr.mxu0 0.0
      %630 = vmatpush1.msra.mxu0 %v563
      %631 = vmatprep.subr.mxu0 0.0
      %632 = vmatpush1.msra.mxu0 %v562
      %633 = vmatprep.subr.mxu0 0.0
      %634 = vmatpush2.msra.mxu0 %v593
      %635 = vmatprep.subr.mxu0 0.0
      %636 = vmatpush2.msra.mxu0 %v592
      %637 = vmatprep.subr.mxu0 0.0
      %638 = vmatpush2.msra.mxu0 %v591
      %639 = vmatprep.subr.mxu0 0.0
      %640 = vmatpush2.msra.mxu0 %v590
      %641 = vmatprep.subr.mxu0 0.0
      %642 = vmatpush2.msra.mxu0 %v589
      %643 = vmatprep.subr.mxu0 0.0
      %644 = vmatpush2.msra.mxu0 %v588
      %645 = vmatprep.subr.mxu0 0.0
      %646 = vmatpush2.msra.mxu0 %v587
      %647 = vmatprep.subr.mxu0 0.0
      %648 = vmatpush2.msra.mxu0 %v586
      %649 = vmatprep.subr.mxu0 0.0
      %650 = vmatpush2.msra.mxu0 %v585
      %651 = vmatprep.subr.mxu0 0.0
      %652 = vmatpush2.msra.mxu0 %v584
      %653 = vmatprep.subr.mxu0 0.0
      %654 = vmatpush2.msra.mxu0 %v583
      %655 = vmatprep.subr.mxu0 0.0
      %656 = vmatpush2.msra.mxu0 %v582
      %657 = vmatprep.subr.mxu0 0.0
      %658 = vmatpush2.msra.mxu0 %v581
      %659 = vmatprep.subr.mxu0 0.0
      %660 = vmatpush2.msra.mxu0 %v580
      %661 = vmatprep.subr.mxu0 0.0
      %662 = vmatpush2.msra.mxu0 %v579
      %663 = vmatprep.subr.mxu0 0.0
      %664 = vmatpush2.msra.mxu0 %v578
      %665 = vmatprep.mubr.f32.mxu0 %v531
      %666 = vmatmul.mubr.f32.gmra.mxu0 %v530
      %v667 = vpop.f32.mrf.mxu0
      %v668 = vadd.f32 %v599, %v667
      %v669 = vpop.f32.mrf.mxu0
      %670 = vmatprep.mubr.f32.mxu0 %v533
      %671 = vmatmul.mubr.f32.gmra.mxu0 %v532
      %v672 = vpop.f32.mrf.mxu0
      %v673 = vadd.f32 %v599, %v672
      %v674 = vpop.f32.mrf.mxu0
      %675 = vmatprep.mubr.f32.mxu0 %v535
      %676 = vmatmul.mubr.f32.gmra.mxu0 %v534
      %v677 = vpop.f32.mrf.mxu0
      %v678 = vadd.f32 %v599, %v677
      %v679 = vpop.f32.mrf.mxu0
      %680 = vmatprep.mubr.f32.mxu0 %v537
      %681 = vmatmul.mubr.f32.gmra.mxu0 %v536
      %v682 = vpop.f32.mrf.mxu0
      %v683 = vadd.f32 %v599, %v682
      %v684 = vpop.f32.mrf.mxu0
      %685 = vmatprep.mubr.f32.mxu0 %v539
      %686 = vmatmul.mubr.f32.gmra.mxu0 %v538
      %v687 = vpop.f32.mrf.mxu0
      %v688 = vadd.f32 %v599, %v687
      %v689 = vpop.f32.mrf.mxu0
      %690 = vmatprep.mubr.f32.mxu0 %v541
      %691 = vmatmul.mubr.f32.gmra.mxu0 %v540
      %v692 = vpop.f32.mrf.mxu0
      %v693 = vadd.f32 %v599, %v692
      %v694 = vpop.f32.mrf.mxu0
      %695 = vmatprep.mubr.f32.mxu0 %v543
      %696 = vmatmul.mubr.f32.gmra.mxu0 %v542
      %v697 = vpop.f32.mrf.mxu0
      %v698 = vadd.f32 %v599, %v697
      %v699 = vpop.f32.mrf.mxu0
      %700 = vmatprep.mubr.f32.mxu0 %v545
      %701 = vmatmul.mubr.f32.gmra.mxu0 %v544
      %v702 = vpop.f32.mrf.mxu0
      %v703 = vadd.f32 %v599, %v702
      %v704 = vpop.f32.mrf.mxu0
      %705 = vmatprep.mubr.f32.mxu0 %v547
      %706 = vmatmul.mubr.f32.gmra.mxu0 %v546
      %v707 = vpop.f32.mrf.mxu0
      %v708 = vadd.f32 %v599, %v707
      %v709 = vpop.f32.mrf.mxu0
      %710 = vmatprep.mubr.f32.mxu0 %v549
      %711 = vmatmul.mubr.f32.gmra.mxu0 %v548
      %v712 = vpop.f32.mrf.mxu0
      %v713 = vadd.f32 %v599, %v712
      %v714 = vpop.f32.mrf.mxu0
      %715 = vmatprep.mubr.f32.mxu0 %v551
      %716 = vmatmul.mubr.f32.gmra.mxu0 %v550
      %v717 = vpop.f32.mrf.mxu0
      %v718 = vadd.f32 %v599, %v717
      %v719 = vpop.f32.mrf.mxu0
      %720 = vmatprep.mubr.f32.mxu0 %v553
      %721 = vmatmul.mubr.f32.gmra.mxu0 %v552
      %v722 = vpop.f32.mrf.mxu0
      %v723 = vadd.f32 %v599, %v722
      %v724 = vpop.f32.mrf.mxu0
      %725 = vmatprep.mubr.f32.mxu0 %v555
      %726 = vmatmul.mubr.f32.gmra.mxu0 %v554
      %v727 = vpop.f32.mrf.mxu0
      %v728 = vadd.f32 %v599, %v727
      %v729 = vpop.f32.mrf.mxu0
      %730 = vmatprep.mubr.f32.mxu0 %v557
      %731 = vmatmul.mubr.f32.gmra.mxu0 %v556
      %v732 = vpop.f32.mrf.mxu0
      %v733 = vadd.f32 %v599, %v732
      %v734 = vpop.f32.mrf.mxu0
      %735 = vmatprep.mubr.f32.mxu0 %v559
      %736 = vmatmul.mubr.f32.gmra.mxu0 %v558
      %v737 = vpop.f32.mrf.mxu0
      %v738 = vadd.f32 %v599, %v737
      %v739 = vpop.f32.mrf.mxu0
      %740 = vmatprep.mubr.f32.mxu0 %v561
      %741 = vmatmul.mubr.f32.gmra.mxu0 %v560
      %v742 = vpop.f32.mrf.mxu0
      %v743 = vadd.f32 %v599, %v742
      %v744 = vpop.f32.mrf.mxu0
      %745 = vdwg.mxu0
      %v746 = vmax.f32 %v668, 0.0
      %v747 = vmax.f32 %v673, 0.0
      %v748 = vmax.f32 %v678, 0.0
      %v749 = vmax.f32 %v683, 0.0
      %v750 = vmax.f32 %v688, 0.0
      %v751 = vmax.f32 %v693, 0.0
      %v752 = vmax.f32 %v698, 0.0
      %v753 = vmax.f32 %v703, 0.0
      %v754 = vmax.f32 %v708, 0.0
      %v755 = vmax.f32 %v713, 0.0
      %v756 = vmax.f32 %v718, 0.0
      %v757 = vmax.f32 %v723, 0.0
      %v758 = vmax.f32 %v728, 0.0
      %v759 = vmax.f32 %v733, 0.0
      %v760 = vmax.f32 %v738, 0.0
      %v761 = vmax.f32 %v743, 0.0
      %v762 = vld [vmem:[%s5] sm:$0xff]
      %v763 = vld [vmem:[%s5 + $0x8] sm:$0xff]
      %v764 = vld [vmem:[%s5 + $0x10] sm:$0xff]
      %v765 = vld [vmem:[%s5 + $0x18] sm:$0xff]
      %v766 = vld [vmem:[%s5 + $0x20] sm:$0xff]
      %v767 = vld [vmem:[%s5 + $0x28] sm:$0xff]
      %v768 = vld [vmem:[%s5 + $0x30] sm:$0xff]
      %v769 = vld [vmem:[%s5 + $0x38] sm:$0xff]
      %v770 = vld [vmem:[%s5 + $0x40] sm:$0xff]
      %v771 = vld [vmem:[%s5 + $0x48] sm:$0xff]
      %v772 = vld [vmem:[%s5 + $0x50] sm:$0xff]
      %v773 = vld [vmem:[%s5 + $0x58] sm:$0xff]
      %v774 = vld [vmem:[%s5 + $0x60] sm:$0xff]
      %v775 = vld [vmem:[%s5 + $0x68] sm:$0xff]
      %v776 = vld [vmem:[%s5 + $0x70] sm:$0xff]
      %v777 = vld [vmem:[%s5 + $0x78] sm:$0xff]
      %v778 = vld [vmem:[%s5 + $0x80] sm:$0xff]
      %v779 = vld [vmem:[%s5 + $0x88] sm:$0xff]
      %v780 = vld [vmem:[%s5 + $0x90] sm:$0xff]
      %v781 = vld [vmem:[%s5 + $0x98] sm:$0xff]
      %v782 = vld [vmem:[%s5 + $0xa0] sm:$0xff]
      %v783 = vld [vmem:[%s5 + $0xa8] sm:$0xff]
      %v784 = vld [vmem:[%s5 + $0xb0] sm:$0xff]
      %v785 = vld [vmem:[%s5 + $0xb8] sm:$0xff]
      %v786 = vld [vmem:[%s5 + $0xc0] sm:$0xff]
      %v787 = vld [vmem:[%s5 + $0xc8] sm:$0xff]
      %v788 = vld [vmem:[%s5 + $0xd0] sm:$0xff]
      %v789 = vld [vmem:[%s5 + $0xd8] sm:$0xff]
      %v790 = vld [vmem:[%s5 + $0xe0] sm:$0xff]
      %v791 = vld [vmem:[%s5 + $0xe8] sm:$0xff]
      %v792 = vld [vmem:[%s5 + $0xf0] sm:$0xff]
      %v793 = vld [vmem:[%s5 + $0xf8] sm:$0xff]
      %v794 = vld [vmem:[%s6] sm:$0x3]
      %v796 = vlaneseq
      %v797 = vshrl.u32 %v796, 7
      %v798 = vsub.s32 0, %v797
      %v799 = vrot.slane %v794, %v798
      %v800 = vlaneseq
      %v801 = vshrl.u32 %v800, 7
      %v802 = vsub.s32 1, %v801
      %v803 = vrot.slane %v794, %v802
      %806 = vmatprep.subr.mxu0 %v793
      %807 = vmatpush1.msra.mxu0 %v792
      %808 = vmatprep.subr.mxu0 %v791
      %809 = vmatpush1.msra.mxu0 %v790
      %810 = vmatprep.subr.mxu0 %v789
      %811 = vmatpush1.msra.mxu0 %v788
      %812 = vmatprep.subr.mxu0 %v787
      %813 = vmatpush1.msra.mxu0 %v786
      %814 = vmatprep.subr.mxu0 %v785
      %815 = vmatpush1.msra.mxu0 %v784
      %816 = vmatprep.subr.mxu0 %v783
      %817 = vmatpush1.msra.mxu0 %v782
      %818 = vmatprep.subr.mxu0 %v781
      %819 = vmatpush1.msra.mxu0 %v780
      %820 = vmatprep.subr.mxu0 %v779
      %821 = vmatpush1.msra.mxu0 %v778
      %822 = vmatprep.subr.mxu0 %v777
      %823 = vmatpush1.msra.mxu0 %v776
      %824 = vmatprep.subr.mxu0 %v775
      %825 = vmatpush1.msra.mxu0 %v774
      %826 = vmatprep.subr.mxu0 %v773
      %827 = vmatpush1.msra.mxu0 %v772
      %828 = vmatprep.subr.mxu0 %v771
      %829 = vmatpush1.msra.mxu0 %v770
      %830 = vmatprep.subr.mxu0 %v769
      %831 = vmatpush1.msra.mxu0 %v768
      %832 = vmatprep.subr.mxu0 %v767
      %833 = vmatpush1.msra.mxu0 %v766
      %834 = vmatprep.subr.mxu0 %v765
      %835 = vmatpush1.msra.mxu0 %v764
      %836 = vmatprep.subr.mxu0 %v763
      %837 = vmatpush1.msra.mxu0 %v762
      %838 = vmatprep.subr.mxu0 0.0
      %839 = vmatpush2.msra.mxu0 0.0
      %840 = vmatprep.subr.mxu0 0.0
      %841 = vmatpush2.msra.mxu0 0.0
      %842 = vmatprep.subr.mxu0 0.0
      %843 = vmatpush2.msra.mxu0 0.0
      %844 = vmatprep.subr.mxu0 0.0
      %845 = vmatpush2.msra.mxu0 0.0
      %846 = vmatprep.subr.mxu0 0.0
      %847 = vmatpush2.msra.mxu0 0.0
      %848 = vmatprep.subr.mxu0 0.0
      %849 = vmatpush2.msra.mxu0 0.0
      %850 = vmatprep.subr.mxu0 0.0
      %851 = vmatpush2.msra.mxu0 0.0
      %852 = vmatprep.subr.mxu0 0.0
      %853 = vmatpush2.msra.mxu0 0.0
      %854 = vmatprep.subr.mxu0 0.0
      %855 = vmatpush2.msra.mxu0 0.0
      %856 = vmatprep.subr.mxu0 0.0
      %857 = vmatpush2.msra.mxu0 0.0
      %858 = vmatprep.subr.mxu0 0.0
      %859 = vmatpush2.msra.mxu0 0.0
      %860 = vmatprep.subr.mxu0 0.0
      %861 = vmatpush2.msra.mxu0 0.0
      %862 = vmatprep.subr.mxu0 0.0
      %863 = vmatpush2.msra.mxu0 0.0
      %864 = vmatprep.subr.mxu0 0.0
      %865 = vmatpush2.msra.mxu0 0.0
      %866 = vmatprep.subr.mxu0 0.0
      %867 = vmatpush2.msra.mxu0 0.0
      %868 = vmatprep.subr.mxu0 0.0
      %869 = vmatpush2.msra.mxu0 0.0
      %870 = vmatprep.mubr.f32.mxu0 0.0
      %871 = vmatmul.mubr.f32.gmra.mxu0 %v746
      %v872 = vpop.f32.mrf.mxu0
      %v873 = vadd.f32 %v799, %v872
      %v874 = vpop.f32.mrf.mxu0
      %v875 = vadd.f32 %v803, %v874
      %876 = vmatprep.mubr.f32.mxu0 0.0
      %877 = vmatmul.mubr.f32.gmra.mxu0 %v747
      %v878 = vpop.f32.mrf.mxu0
      %v879 = vadd.f32 %v799, %v878
      %v880 = vpop.f32.mrf.mxu0
      %v881 = vadd.f32 %v803, %v880
      %882 = vmatprep.mubr.f32.mxu0 0.0
      %883 = vmatmul.mubr.f32.gmra.mxu0 %v748
      %v884 = vpop.f32.mrf.mxu0
      %v885 = vadd.f32 %v799, %v884
      %v886 = vpop.f32.mrf.mxu0
      %v887 = vadd.f32 %v803, %v886
      %888 = vmatprep.mubr.f32.mxu0 0.0
      %889 = vmatmul.mubr.f32.gmra.mxu0 %v749
      %v890 = vpop.f32.mrf.mxu0
      %v891 = vadd.f32 %v799, %v890
      %v892 = vpop.f32.mrf.mxu0
      %v893 = vadd.f32 %v803, %v892
      %894 = vmatprep.mubr.f32.mxu0 0.0
      %895 = vmatmul.mubr.f32.gmra.mxu0 %v750
      %v896 = vpop.f32.mrf.mxu0
      %v897 = vadd.f32 %v799, %v896
      %v898 = vpop.f32.mrf.mxu0
      %v899 = vadd.f32 %v803, %v898
      %900 = vmatprep.mubr.f32.mxu0 0.0
      %901 = vmatmul.mubr.f32.gmra.mxu0 %v751
      %v902 = vpop.f32.mrf.mxu0
      %v903 = vadd.f32 %v799, %v902
      %v904 = vpop.f32.mrf.mxu0
      %v905 = vadd.f32 %v803, %v904
      %906 = vmatprep.mubr.f32.mxu0 0.0
      %907 = vmatmul.mubr.f32.gmra.mxu0 %v752
      %v908 = vpop.f32.mrf.mxu0
      %v909 = vadd.f32 %v799, %v908
      %v910 = vpop.f32.mrf.mxu0
      %v911 = vadd.f32 %v803, %v910
      %912 = vmatprep.mubr.f32.mxu0 0.0
      %913 = vmatmul.mubr.f32.gmra.mxu0 %v753
      %v914 = vpop.f32.mrf.mxu0
      %v915 = vadd.f32 %v799, %v914
      %v916 = vpop.f32.mrf.mxu0
      %v917 = vadd.f32 %v803, %v916
      %918 = vmatprep.mubr.f32.mxu0 0.0
      %919 = vmatmul.mubr.f32.gmra.mxu0 %v754
      %v920 = vpop.f32.mrf.mxu0
      %v921 = vadd.f32 %v799, %v920
      %v922 = vpop.f32.mrf.mxu0
      %v923 = vadd.f32 %v803, %v922
      %924 = vmatprep.mubr.f32.mxu0 0.0
      %925 = vmatmul.mubr.f32.gmra.mxu0 %v755
      %v926 = vpop.f32.mrf.mxu0
      %v927 = vadd.f32 %v799, %v926
      %v928 = vpop.f32.mrf.mxu0
      %v929 = vadd.f32 %v803, %v928
      %930 = vmatprep.mubr.f32.mxu0 0.0
      %931 = vmatmul.mubr.f32.gmra.mxu0 %v756
      %v932 = vpop.f32.mrf.mxu0
      %v933 = vadd.f32 %v799, %v932
      %v934 = vpop.f32.mrf.mxu0
      %v935 = vadd.f32 %v803, %v934
      %936 = vmatprep.mubr.f32.mxu0 0.0
      %937 = vmatmul.mubr.f32.gmra.mxu0 %v757
      %v938 = vpop.f32.mrf.mxu0
      %v939 = vadd.f32 %v799, %v938
      %v940 = vpop.f32.mrf.mxu0
      %v941 = vadd.f32 %v803, %v940
      %942 = vmatprep.mubr.f32.mxu0 0.0
      %943 = vmatmul.mubr.f32.gmra.mxu0 %v758
      %v944 = vpop.f32.mrf.mxu0
      %v945 = vadd.f32 %v799, %v944
      %v946 = vpop.f32.mrf.mxu0
      %v947 = vadd.f32 %v803, %v946
      %948 = vmatprep.mubr.f32.mxu0 0.0
      %949 = vmatmul.mubr.f32.gmra.mxu0 %v759
      %v950 = vpop.f32.mrf.mxu0
      %v951 = vadd.f32 %v799, %v950
      %v952 = vpop.f32.mrf.mxu0
      %v953 = vadd.f32 %v803, %v952
      %954 = vmatprep.mubr.f32.mxu0 0.0
      %955 = vmatmul.mubr.f32.gmra.mxu0 %v760
      %v956 = vpop.f32.mrf.mxu0
      %v957 = vadd.f32 %v799, %v956
      %v958 = vpop.f32.mrf.mxu0
      %v959 = vadd.f32 %v803, %v958
      %960 = vmatprep.mubr.f32.mxu0 0.0
      %961 = vmatmul.mubr.f32.gmra.mxu0 %v761
      %v962 = vpop.f32.mrf.mxu0
      %v963 = vadd.f32 %v799, %v962
      %v964 = vpop.f32.mrf.mxu0
      %v965 = vadd.f32 %v803, %v964
      %966 = vdwg.mxu0
      %967 = vst [vmem:[%s282] sm:$0xff] %v873
      %968 = vst [vmem:[%s282 + $0x8] sm:$0xff] %v875
      %969 = vst [vmem:[%s282 + $0x10] sm:$0xff] %v879
      %970 = vst [vmem:[%s282 + $0x18] sm:$0xff] %v881
      %971 = vst [vmem:[%s282 + $0x20] sm:$0xff] %v885
      %972 = vst [vmem:[%s282 + $0x28] sm:$0xff] %v887
      %973 = vst [vmem:[%s282 + $0x30] sm:$0xff] %v891
      %974 = vst [vmem:[%s282 + $0x38] sm:$0xff] %v893
      %975 = vst [vmem:[%s282 + $0x40] sm:$0xff] %v897
      %976 = vst [vmem:[%s282 + $0x48] sm:$0xff] %v899
      %977 = vst [vmem:[%s282 + $0x50] sm:$0xff] %v903
      %978 = vst [vmem:[%s282 + $0x58] sm:$0xff] %v905
      %979 = vst [vmem:[%s282 + $0x60] sm:$0xff] %v909
      %980 = vst [vmem:[%s282 + $0x68] sm:$0xff] %v911
      %981 = vst [vmem:[%s282 + $0x70] sm:$0xff] %v915
      %982 = vst [vmem:[%s282 + $0x78] sm:$0xff] %v917
      %983 = vst [vmem:[%s282 + $0x80] sm:$0xff] %v921
      %984 = vst [vmem:[%s282 + $0x88] sm:$0xff] %v923
      %985 = vst [vmem:[%s282 + $0x90] sm:$0xff] %v927
      %986 = vst [vmem:[%s282 + $0x98] sm:$0xff] %v929
      %987 = vst [vmem:[%s282 + $0xa0] sm:$0xff] %v933
      %988 = vst [vmem:[%s282 + $0xa8] sm:$0xff] %v935
      %989 = vst [vmem:[%s282 + $0xb0] sm:$0xff] %v939
      %990 = vst [vmem:[%s282 + $0xb8] sm:$0xff] %v941
      %991 = vst [vmem:[%s282 + $0xc0] sm:$0xff] %v945
      %992 = vst [vmem:[%s282 + $0xc8] sm:$0xff] %v947
      %993 = vst [vmem:[%s282 + $0xd0] sm:$0xff] %v951
      %994 = vst [vmem:[%s282 + $0xd8] sm:$0xff] %v953
      %995 = vst [vmem:[%s282 + $0xe0] sm:$0xff] %v957
      %996 = vst [vmem:[%s282 + $0xe8] sm:$0xff] %v959
      %997 = vst [vmem:[%s282 + $0xf0] sm:$0xff] %v963
      %998 = vst [vmem:[%s282 + $0xf8] sm:$0xff] %v965
      %s999 = smul.u32 16, %s18
      %p1000 = scmp.lt.s32.totalorder %s999, 31
      %s1001 = scalar_select %p1000, %s999, 31
      %s1002 = smul.addr %s1001, 2
      %s1003 = smul.addr %s1002, 8
      %s1004 = scalar_lea.vmem %s7, %s1003
      // Predicated region
      $region49: #{_mlp_forward.1} parent=47 // pred_check
        %p1005 = pneg %p188
      $region50: #{_mlp_forward.1} parent=47 // pred_check_branch
        %1007 = sbr.rel (%p1005) target = $region52
      $region51: #{_mlp_forward.1} parent=47 // pred_region
        %s1008 = smul.u32 16, %s18
      $region52: #{_mlp_forward.1} parent=47 // pred_fallthru
        _
    $region48: #{_mlp_forward.1} parent=5 // pred_fallthru
      _
    %p1009 = scmp.le.s32.totalorder 2, %s13
    // Predicated region
    $region53: #{_mlp_forward.1} parent=5 // pred_check
      %p1010 = pneg %p1009
    $region54: #{_mlp_forward.1} parent=5 // pred_check_branch
      %1012 = sbr.rel (%p1010) target = $region56
    $region55: #{_mlp_forward.1} parent=5 // pred_region
      %s1013 = ssub.s32 %s13, 2
      // Predicated region
      $region57: #{_mlp_forward.1} parent=55 // pred_check
        %p1014 = pneg %p194
      $region58: #{_mlp_forward.1} parent=55 // pred_check_branch
        %1016 = sbr.rel (%p1014) target = $region60
      $region59: #{_mlp_forward.1} parent=55 // pred_region
        %s1017 = smul.u32 16, %s19
        %p1018 = scmp.lt.s32.totalorder %s1017, 31
        %s1019 = scalar_select %p1018, %s1017, 31
        %s1020 = smul.addr %s1019, 2
        %s1021 = smul.addr %s1020, 8
        %s1022 = scalar_lea.vmem %s7, %s1021
      $region60: #{_mlp_forward.1} parent=55 // pred_fallthru
        _
    $region56: #{_mlp_forward.1} parent=5 // pred_fallthru
      _
  $region6: #{_mlp_forward.1} parent=0 // loop_footer
    %s17 = sadd.s32 1, %s13
  $region7: #{_mlp_forward.1} parent=0 // loop_footer_branch
    %12 = sbr.rel target = $region3
  $region8: #{_mlp_forward.1} parent=0 // loop_exit
    _

</llo_original>
